<compile_context>
chip_gen: v5e
topology: v5e:2x2
jax: 0.10.0
libtpu: 0.0.40
codegen_flags: <defaults>
</compile_context>

<pallas_src>
import numpy as np
import jax
import jax.numpy as jnp
from jax.experimental import pallas as pl
from jax.experimental.pallas import tpu as pltpu

EPS = 1e-5
_HIGHEST = jax.lax.Precision.HIGHEST


# ----------------------------------------------------------------------------- #
# Kernel
# ----------------------------------------------------------------------------- #
def hunet_kernel(x_ref, w_ref, c_ref, s_ref, out_ref):
    # x_ref : (16, TB) rows 0..6 = hu_a^T, 7 = zeros, 8..14 = hu_b^T, 15 = zeros
    # w_ref : (64, 16) block-diagonal folded bn0->fc1->bn1 weight (zero cols 7/15)
    # c_ref : (64, 2)  col 0 = folded bias (stacked twice), col 1 = [-w2h ; +w2h]
    # s_ref : (2,)     SMEM scalars: [head weight for d_hu, head bias]
    x = x_ref[...]                                                          # (16, TB)

    # d_hu = sum_f |hu_b - hu_a|; the zero pad rows (7 vs 15) contribute nothing.
    # Both slices are sublane-tile aligned (8-row halves of a 16-row block).
    d_hu = jnp.sum(jnp.abs(x[8:16, :] - x[0:8, :]), axis=0, keepdims=True)  # (1, TB)

    # Folded bn0 -> fc1 -> bn1 for BOTH inputs in one block-diagonal MXU matmul,
    # exact f32 bias add on the VPU, then relu.
    h = jnp.dot(w_ref[...], x, preferred_element_type=jnp.float32)          # (64, TB)
    h = jnp.maximum(h + c_ref[:, 0:1], 0.0)

    # fc2 + head folded:  sum_i (h_b - h_a)_i * w2h_i  ==  sum_r h_r * (+-w2h)_r
    core = jnp.sum(h * c_ref[:, 1:2], axis=0, keepdims=True)                # (1, TB)

    logits = core + s_ref[0] * d_hu + s_ref[1]
    out_ref[...] = jax.nn.sigmoid(logits)


# ----------------------------------------------------------------------------- #
# One-time host-side folding (hoisted out of the per-call path)
# ----------------------------------------------------------------------------- #
def fold_bn(gamma, beta, mean, var):
    scale = gamma / jnp.sqrt(var + EPS)
    shift = beta - mean * scale
    return scale, shift


def fold_params(p):
    bn0_s, bn0_b = fold_bn(p["bn0_gamma"], p["bn0_beta"], p["bn0_mean"], p["bn0_var"])
    bn1_s, bn1_b = fold_bn(p["bn1_gamma"], p["bn1_beta"], p["bn1_mean"], p["bn1_var"])

    # bn0 -> fc1 -> bn1 folded:  h = x @ w1f + b1f
    w1f = (bn0_s[:, None] * p["w1"]) * bn1_s[None, :]                       # (7, 32)
    b1f = (jnp.dot(bn0_b, p["w1"], precision=_HIGHEST) * bn1_s
           + p["b1"] * bn1_s + bn1_b)                                       # (32,)

    # fc2 + head folded (b2 cancels in embed16(b) - embed16(a))
    w2h = jnp.dot(p["w2"], p["wh"][1:, :], precision=_HIGHEST)              # (32, 1)

    # Block-diagonal (64, 16) matmul weight; columns 7 / 15 stay zero (they line up
    # with the zero pad rows of the packed input).
    w1t = w1f.T                                                             # (32, 7)
    w_big = jnp.zeros((64, 16), jnp.float32)
    w_big = w_big.at[0:32, 0:7].set(w1t).at[32:64, 8:15].set(w1t)

    # (64, 2) const block: col 0 = bias for both halves, col 1 = [-w2h ; +w2h] so the
    # head core is one 64-row VPU multiply + sublane (XLU) reduce.
    bias64 = jnp.concatenate([b1f, b1f])[:, None]                           # (64, 1)
    v64 = jnp.concatenate([-w2h, w2h], axis=0)                              # (64, 1)
    consts = jnp.concatenate([bias64, v64], axis=1)                         # (64, 2)

    scal = jnp.concatenate([p["wh"][0], p["bh"]]).astype(jnp.float32)       # (2,)
    return {"w_big": w_big, "consts": consts, "scal": scal}


# ----------------------------------------------------------------------------- #
# Tile policy + jitted forward
# ----------------------------------------------------------------------------- #
_TILE_CANDIDATES = (16384, 8192, 4096, 2048, 1024, 512, 256, 128)


def _pick_tile(batch):
    # Largest lane-aligned tile that still leaves >=4 grid steps (2 per v7x TC after
    # the "parallel" axis is sharded, keeping per-core double-buffering), falling
    # back to >=2 steps, then a single 128-lane vreg for tiny batches.
    for steps in (4, 2):
        for tb in _TILE_CANDIDATES:
            if batch >= steps * tb:
                return tb
    return 128


@jax.jit
def hunet_forward(hu_a, hu_b, folded):
    B = hu_a.shape[0]
    tb = _pick_tile(B)
    Bp = ((B + tb - 1) // tb) * tb

    # Packed, transposed (batch-on-lanes) activations: one lane-dense DMA per step.
    # Rows 7 / 15 stay zero (pad); the bias is added inside the kernel instead.
    # Under jit this pack fuses with the transposes; padded lanes stay finite.
    x_packed = jnp.zeros((16, Bp), jnp.float32)
    x_packed = x_packed.at[0:7, :B].set(hu_a.T)
    x_packed = x_packed.at[8:15, :B].set(hu_b.T)

    const = lambda shape: pl.BlockSpec(shape, lambda i: (0, 0))
    out = pl.pallas_call(
        hunet_kernel,
        out_shape=jax.ShapeDtypeStruct((1, Bp), jnp.float32),
        grid_spec=pltpu.PrefetchScalarGridSpec(
            num_scalar_prefetch=0,
            grid=(Bp // tb,),
            in_specs=[
                pl.BlockSpec((16, tb), lambda i: (0, i)),            # activations
                const((64, 16)),                                     # folded fc1 weight
                const((64, 2)),                                      # bias + head vector
                pl.BlockSpec(memory_space=pltpu.MemorySpace.SMEM),   # [w_hu, b_head]
            ],
            out_specs=pl.BlockSpec((1, tb), lambda i: (0, i)),
        ),
        compiler_params=pltpu.CompilerParams(
            dimension_semantics=("parallel",),
            # Big tiles + the (64, tb) f32 intermediate need more than v5e's 16 MiB
            # scoped default; 32 MiB stays safely below v7x's 64 MiB physical VMEM.
            vmem_limit_bytes=32 * 1024 * 1024,
        ),
    )(x_packed, folded["w_big"], folded["consts"], folded["scal"])

    return out[0, :B].reshape(B, 1)


# ----------------------------------------------------------------------------- #
# Parameters + pure-JAX reference of the un-folded module (inference-mode BN)
# ----------------------------------------------------------------------------- #
def make_params(key):
    ks = jax.random.split(key, 12)
    p = {}
    # Linear weights stored as (in, out) so references compute x @ W.
    p["w1"] = jax.random.normal(ks[0], (7, 32), jnp.float32) * 0.3
    p["b1"] = jax.random.normal(ks[1], (32,), jnp.float32) * 0.1
    p["w2"] = jax.random.normal(ks[2], (32, 16), jnp.float32) * 0.3
    p["b2"] = jax.random.normal(ks[3], (16,), jnp.float32) * 0.1
    p["wh"] = jax.random.normal(ks[4], (17, 1), jnp.float32) * 0.3
    p["bh"] = jax.random.normal(ks[5], (1,), jnp.float32) * 0.1
    # BatchNorm1d(7)
    p["bn0_gamma"] = jax.random.normal(ks[6], (7,), jnp.float32) * 0.2 + 1.0
    p["bn0_beta"] = jax.random.normal(ks[7], (7,), jnp.float32) * 0.1
    p["bn0_mean"] = jax.random.normal(ks[8], (7,), jnp.float32) * 0.1
    p["bn0_var"] = jax.nn.softplus(jax.random.normal(ks[9], (7,), jnp.float32)) + 0.5
    # BatchNorm1d(32)
    p["bn1_gamma"] = jax.random.normal(ks[10], (32,), jnp.float32) * 0.2 + 1.0
    p["bn1_beta"] = jax.random.normal(ks[11], (32,), jnp.float32) * 0.1
    p["bn1_mean"] = jnp.zeros((32,), jnp.float32)
    p["bn1_var"] = jnp.ones((32,), jnp.float32)
    return p


def hunet_reference(hu_a, hu_b, p):
    def bn(x, g, b, m, v):
        return (x - m) / jnp.sqrt(v + EPS) * g + b

    def embed16(x):
        x = bn(x, p["bn0_gamma"], p["bn0_beta"], p["bn0_mean"], p["bn0_var"])
        h = jnp.dot(x, p["w1"], precision=_HIGHEST) + p["b1"]
        h = jnp.maximum(bn(h, p["bn1_gamma"], p["bn1_beta"],
                           p["bn1_mean"], p["bn1_var"]), 0.0)
        return jnp.dot(h, p["w2"], precision=_HIGHEST) + p["b2"]

    d_hu = jnp.sum(jnp.abs(hu_b - hu_a), axis=1, keepdims=True)
    d16 = embed16(hu_b) - embed16(hu_a)
    feats = jnp.concatenate([d_hu, d16], axis=1)
    return jax.nn.sigmoid(jnp.dot(feats, p["wh"], precision=_HIGHEST) + p["bh"])


# ----------------------------------------------------------------------------- #
if __name__ == "__main__":
    key = jax.random.PRNGKey(0)
    k_a, k_b, k_p, k_a2, k_b2, k_a3, k_b3 = jax.random.split(key, 7)

    params = make_params(k_p)
    folded = fold_params(params)   # one-time folding, hoisted out of the forward

    def check(B, ka, kb):
        hu_a = jax.random.normal(ka, (B, 7), jnp.float32)
        hu_b = jax.random.normal(kb, (B, 7), jnp.float32)
        out = jax.block_until_ready(hunet_forward(hu_a, hu_b, folded))
        ref = jax.block_until_ready(hunet_reference(hu_a, hu_b, params))
        assert out.shape == (B, 1), out.shape
        np.testing.assert_allclose(np.asarray(out), np.asarray(ref),
                                   atol=3e-5, rtol=3e-5)

    check(16, k_a, k_b)       # single grid step (16 -> 128-lane pad)
    check(300, k_a2, k_b2)    # multiple grid steps + batch padding (300 -> 384)
    check(5000, k_a3, k_b3)   # larger tile path (tb=1024, 5 grid steps)

    print("KERNEL_OK")
</pallas_src>

<mosaic_0001>
module attributes {stable_mosaic.version = 11 : i64} {
  func.func @hunet_kernel(%arg0: i32, %arg1: memref<16x128xf32, #tpu.memory_space<vmem>>, %arg2: memref<64x16xf32, #tpu.memory_space<vmem>>, %arg3: memref<64x2xf32, #tpu.memory_space<vmem>>, %arg4: memref<2xf32, #tpu.memory_space<smem>>, %arg5: memref<1x128xf32, #tpu.memory_space<vmem>>) attributes {dimension_semantics = [#tpu.dimension_semantics<parallel>], iteration_bounds = array<i64: 1>, scalar_prefetch = 0 : i64, scratch_operands = 0 : i64, tpu.core_type = #tpu.core_type<tc>, window_params = [{transform_indices = @transform_0, window_bounds = array<i64: 16, 128>}, {pipeline_mode = #tpu.pipeline_mode<synchronous>, transform_indices = @transform_1, window_bounds = array<i64: 64, 16>}, {pipeline_mode = #tpu.pipeline_mode<synchronous>, transform_indices = @transform_2, window_bounds = array<i64: 64, 2>}, {transform_indices = @transform_3, window_bounds = array<i64: 2>}, {transform_indices = @transform_4, window_bounds = array<i64: 1, 128>}]} {
    %c0 = arith.constant 0 : index
    %c0_0 = arith.constant 0 : index
    %0 = vector.load %arg1[%c0, %c0_0] : memref<16x128xf32, #tpu.memory_space<vmem>>, vector<16x128xf32>
    %1 = vector.extract_strided_slice %0 {offsets = [8, 0], sizes = [8, 128], strides = [1, 1]} : vector<16x128xf32> to vector<8x128xf32>
    %2 = vector.extract_strided_slice %0 {offsets = [0, 0], sizes = [8, 128], strides = [1, 1]} : vector<16x128xf32> to vector<8x128xf32>
    %3 = arith.subf %1, %2 : vector<8x128xf32>
    %4 = math.absf %3 : vector<8x128xf32>
    %cst = arith.constant dense<0.000000e+00> : vector<128xf32>
    %5 = vector.multi_reduction <add>, %4, %cst [0] : vector<8x128xf32> to vector<128xf32>
    %6 = vector.shape_cast %5 : vector<128xf32> to vector<1x128xf32>
    %c0_1 = arith.constant 0 : index
    %c0_2 = arith.constant 0 : index
    %7 = vector.load %arg2[%c0_1, %c0_2] : memref<64x16xf32, #tpu.memory_space<vmem>>, vector<64x16xf32>
    %cst_3 = arith.constant dense<0.000000e+00> : vector<64x128xf32>
    %8 = tpu.matmul %7, %0, %cst_3 {dimension_numbers = #tpu.dot_dimension_numbers<[1], [0], [0], [1], [0, 0, 1, 1], [], []>} : vector<64x16xf32>, vector<16x128xf32>, vector<64x128xf32> -> vector<64x128xf32>
    %c0_4 = arith.constant 0 : index
    %c0_5 = arith.constant 0 : index
    %9 = vector.load %arg3[%c0_4, %c0_5] : memref<64x2xf32, #tpu.memory_space<vmem>>, vector<64x1xf32>
    %10 = vector.broadcast %9 : vector<64x1xf32> to vector<64x128xf32>
    %11 = arith.addf %8, %10 : vector<64x128xf32>
    %cst_6 = arith.constant 0.000000e+00 : f32
    %12 = vector.broadcast %cst_6 : f32 to vector<64x128xf32>
    %13 = arith.maximumf %11, %12 : vector<64x128xf32>
    %c0_7 = arith.constant 0 : index
    %c1 = arith.constant 1 : index
    %14 = vector.load %arg3[%c0_7, %c1] : memref<64x2xf32, #tpu.memory_space<vmem>>, vector<64x1xf32>
    %15 = vector.broadcast %14 : vector<64x1xf32> to vector<64x128xf32>
    %16 = arith.mulf %13, %15 : vector<64x128xf32>
    %cst_8 = arith.constant dense<0.000000e+00> : vector<128xf32>
    %17 = vector.multi_reduction <add>, %16, %cst_8 [0] : vector<64x128xf32> to vector<128xf32>
    %18 = vector.shape_cast %17 : vector<128xf32> to vector<1x128xf32>
    %c0_9 = arith.constant 0 : index
    %19 = memref.load %arg4[%c0_9] : memref<2xf32, #tpu.memory_space<smem>>
    %20 = vector.broadcast %19 : f32 to vector<1x128xf32>
    %21 = arith.mulf %20, %6 : vector<1x128xf32>
    %22 = arith.addf %18, %21 : vector<1x128xf32>
    %c1_10 = arith.constant 1 : index
    %23 = memref.load %arg4[%c1_10] : memref<2xf32, #tpu.memory_space<smem>>
    %24 = vector.broadcast %23 : f32 to vector<1x128xf32>
    %25 = arith.addf %22, %24 : vector<1x128xf32>
    %26 = arith.negf %25 : vector<1x128xf32>
    %27 = math.exp %26 : vector<1x128xf32>
    %cst_11 = arith.constant 1.000000e+00 : f32
    %28 = vector.broadcast %cst_11 : f32 to vector<1x128xf32>
    %29 = arith.addf %28, %27 : vector<1x128xf32>
    %30 = arith.divf %28, %29 : vector<1x128xf32>
    %c0_12 = arith.constant 0 : index
    %c0_13 = arith.constant 0 : index
    %31 = vector.load %arg5[%c0_12, %c0_13] : memref<1x128xf32, #tpu.memory_space<vmem>>, vector<1x128xf32>
    tpu.vector_store %arg5[%c0_12, %c0_13], %30 {strides = array<i32>} : memref<1x128xf32, #tpu.memory_space<vmem>>, vector<1x128xf32>,
    return
  }
  func.func @transform_0(%arg0: i32) -> (i32, i32) {
    %c0_i32 = arith.constant 0 : i32
    %c0_i32_0 = arith.constant 0 : i32
    return %c0_i32, %arg0 : i32, i32
  }
  func.func @transform_1(%arg0: i32) -> (i32, i32) {
    %c0_i32 = arith.constant 0 : i32
    %c0_i32_0 = arith.constant 0 : i32
    %c0_i32_1 = arith.constant 0 : i32
    return %c0_i32, %c0_i32_0 : i32, i32
  }
  func.func @transform_2(%arg0: i32) -> (i32, i32) {
    %c0_i32 = arith.constant 0 : i32
    %c0_i32_0 = arith.constant 0 : i32
    %c0_i32_1 = arith.constant 0 : i32
    return %c0_i32, %c0_i32_0 : i32, i32
  }
  func.func @transform_3(%arg0: i32) -> i32 {
    %c0_i32 = arith.constant 0 : i32
    %c0_i32_0 = arith.constant 0 : i32
    return %c0_i32 : i32
  }
  func.func @transform_4(%arg0: i32) -> (i32, i32) {
    %c0_i32 = arith.constant 0 : i32
    %c0_i32_0 = arith.constant 0 : i32
    return %c0_i32, %arg0 : i32, i32
  }
}

</mosaic_0001>

<llo_original>
// kernel: hunet_forward.1
$region0: #{hunet_forward.1}
  #allocation0 [shape = 'u32[]', space=smem, size = 0x4, offset = 0x4, fixed_abs, tag = 'smem constant byte address 0x4 - core index']
  #allocation1 [shape = 'u32[72,128]{1,0:T(1,128)}', space=vmem, size = 0x9000, scoped, tag = 'internal scratch']
  %s0 = inlined_call_operand.vmem [shape: f32[16,128], index: 0, kind: input, shape index: {}]
  %s1 = inlined_call_operand.vmem [shape: f32[64,16], index: 1, kind: input, shape index: {}]
  %s2 = inlined_call_operand.vmem [shape: f32[64,2], index: 2, kind: input, shape index: {}]
  %s3 = inlined_call_operand.vmem [shape: f32[2], index: 3, kind: input, shape index: {}]
  %s4 = inlined_call_operand.vmem [shape: f32[1,128], index: 4, kind: output, shape index: {}]
  %s5 = sld [smem:[#allocation0]]
  $region30: #{hunet_forward.1} parent=0
    _
  %s7 = ssub.s32 1, %s5
  %s8 = scalar_select 0, %s7, %s5
  $region1: #{hunet_forward.1} parent=0
    #allocation2 [shape = 'u8[512]{0}', space=smem, size = 0x200, scoped, tag = 'input window, operand 3, single buffered']
    #allocation3 [shape = 's32[1]{0}', space=sflag, size = 0x4, scoped, tag = 'scoped memory for hunet_forward.1']
    %9 = vsyncpa [#allocation3], 0
    // Predicated region
    $region2: #{hunet_forward.1} parent=1 // pred_check
      _
    $region3: #{hunet_forward.1} parent=1 // pred_check_branch
      %11 = sbr.rel (0) target = $region5
    $region4: #{hunet_forward.1} parent=1 // pred_region
      _
    $region5: #{hunet_forward.1} parent=1 // pred_fallthru
      _
    // Predicated region
    $region6: #{hunet_forward.1} parent=1 // pred_check
      _
    $region7: #{hunet_forward.1} parent=1 // pred_check_branch
      %13 = sbr.rel (0) target = $region9
    $region8: #{hunet_forward.1} parent=1 // pred_region
      _
    $region9: #{hunet_forward.1} parent=1 // pred_fallthru
      _
    // Predicated region
    $region10: #{hunet_forward.1} parent=1 // pred_check
      _
    $region11: #{hunet_forward.1} parent=1 // pred_check_branch
      %15 = sbr.rel (0) target = $region13
    $region12: #{hunet_forward.1} parent=1 // pred_region
      _
    $region13: #{hunet_forward.1} parent=1 // pred_fallthru
      _
    // Predicated region
    $region14: #{hunet_forward.1} parent=1 // pred_check
      _
    $region15: #{hunet_forward.1} parent=1 // pred_check_branch
      %17 = sbr.rel (0) target = $region17
    $region16: #{hunet_forward.1} parent=1 // pred_region
      %19 = vsyncadd [#allocation3], 0
      %s21 = sshll.u32 %s3, 4
      %s22 = int_to_ptr.vmem [resolvable:$true] %s21
      %24 = dma.vmem_to_smem %s22, 16, [#allocation2], [#allocation3]
    $region17: #{hunet_forward.1} parent=1 // pred_fallthru
      _
    // Predicated region
    $region18: #{hunet_forward.1} parent=1 // pred_check
      _
    $region19: #{hunet_forward.1} parent=1 // pred_check_branch
      %26 = sbr.rel (0) target = $region21
    $region20: #{hunet_forward.1} parent=1 // pred_region
      %28 = dma.done [#allocation3], 16
    $region21: #{hunet_forward.1} parent=1 // pred_fallthru
      _
    %29 = sfence
    %v30 = vld [vmem:[%s0] sm:$0xff]
    %v31 = vld [vmem:[%s0 + $0x8] sm:$0xff]
    %v32 = vsub.f32 %v31, %v30
    %v33 = vand.u32 2147483647, %v32
    %v34 = vrot.slane %v33, 4
    %v35 = vadd.f32 %v33, %v34
    %v36 = vrot.slane %v35, 2
    %v37 = vadd.f32 %v35, %v36
    %v38 = vrot.slane %v37, 1
    %v39 = vadd.f32 %v37, %v38
    %v40 = vld [vmem:[%s1] sm:$0xff]
    %v41 = vld [vmem:[%s1 + $0x8] sm:$0xff]
    %v42 = vld [vmem:[%s1 + $0x10] sm:$0xff]
    %v43 = vld [vmem:[%s1 + $0x18] sm:$0xff]
    %v44 = vld [vmem:[%s1 + $0x20] sm:$0xff]
    %v45 = vld [vmem:[%s1 + $0x28] sm:$0xff]
    %v46 = vld [vmem:[%s1 + $0x30] sm:$0xff]
    %v47 = vld [vmem:[%s1 + $0x38] sm:$0xff]
    %v48 = vld [vmem:[%s2] sm:$0xff]
    %v49 = vld [vmem:[%s2 + $0x8] sm:$0xff]
    %v50 = vld [vmem:[%s2 + $0x10] sm:$0xff]
    %v51 = vld [vmem:[%s2 + $0x18] sm:$0xff]
    %v52 = vld [vmem:[%s2 + $0x20] sm:$0xff]
    %v53 = vld [vmem:[%s2 + $0x28] sm:$0xff]
    %v54 = vld [vmem:[%s2 + $0x30] sm:$0xff]
    %v55 = vld [vmem:[%s2 + $0x38] sm:$0xff]
    %57 = vset.pattern.permute.xlu0 0
    %58 = vperm.xlu0 %57, %v48
    %v59 = vpop.permute.xlu0 %58
    %62 = vset.pattern.permute.xlu0 0
    %63 = vperm.xlu0 %62, %v49
    %v64 = vpop.permute.xlu0 %63
    %67 = vset.pattern.permute.xlu0 0
    %68 = vperm.xlu0 %67, %v50
    %v69 = vpop.permute.xlu0 %68
    %72 = vset.pattern.permute.xlu0 0
    %73 = vperm.xlu0 %72, %v51
    %v74 = vpop.permute.xlu0 %73
    %77 = vset.pattern.permute.xlu0 0
    %78 = vperm.xlu0 %77, %v52
    %v79 = vpop.permute.xlu0 %78
    %82 = vset.pattern.permute.xlu0 0
    %83 = vperm.xlu0 %82, %v53
    %v84 = vpop.permute.xlu0 %83
    %87 = vset.pattern.permute.xlu0 0
    %88 = vperm.xlu0 %87, %v54
    %v89 = vpop.permute.xlu0 %88
    %92 = vset.pattern.permute.xlu0 0
    %93 = vperm.xlu0 %92, %v55
    %v94 = vpop.permute.xlu0 %93
    %vm96 = vcmask 130048
    %v98 = vsel %vm96, %v40, 0
    %v101 = vsel %vm96, %v41, 0
    %v104 = vsel %vm96, %v42, 0
    %v107 = vsel %vm96, %v43, 0
    %v110 = vsel %vm96, %v44, 0
    %v113 = vsel %vm96, %v45, 0
    %v116 = vsel %vm96, %v46, 0
    %v119 = vsel %vm96, %v47, 0
    %121 = vmatpush.msra.mxu0 0.0
    %122 = vmatpush.msra.mxu0 0.0
    %123 = vmatpush.msra.mxu0 0.0
    %124 = vmatpush.msra.mxu0 0.0
    %125 = vmatpush.msra.mxu0 0.0
    %126 = vmatpush.msra.mxu0 0.0
    %127 = vmatpush.msra.mxu0 0.0
    %128 = vmatpush.msra.mxu0 0.0
    %129 = vmatpush.msra.mxu0 0.0
    %130 = vmatpush.msra.mxu0 0.0
    %131 = vmatpush.msra.mxu0 0.0
    %132 = vmatpush.msra.mxu0 0.0
    %133 = vmatpush.msra.mxu0 0.0
    %134 = vmatpush.msra.mxu0 0.0
    %135 = vmatpush.msra.mxu0 %v31
    %136 = vmatpush.msra.mxu0 %v30
    %137 = vmatmul.f32.gmra.mxu0 %v98
    %v138 = vpop.f32.mrf.mxu0
    %v139 = vadd.f32 %v59, %v138
    %140 = vmatmul.f32.gmra.mxu0 %v101
    %v141 = vpop.f32.mrf.mxu0
    %v142 = vadd.f32 %v64, %v141
    %143 = vmatmul.f32.gmra.mxu0 %v104
    %v144 = vpop.f32.mrf.mxu0
    %v145 = vadd.f32 %v69, %v144
    %146 = vmatmul.f32.gmra.mxu0 %v107
    %v147 = vpop.f32.mrf.mxu0
    %v148 = vadd.f32 %v74, %v147
    %149 = vmatmul.f32.gmra.mxu0 %v110
    %v150 = vpop.f32.mrf.mxu0
    %v151 = vadd.f32 %v79, %v150
    %152 = vmatmul.f32.gmra.mxu0 %v113
    %v153 = vpop.f32.mrf.mxu0
    %v154 = vadd.f32 %v84, %v153
    %155 = vmatmul.f32.gmra.mxu0 %v116
    %v156 = vpop.f32.mrf.mxu0
    %v157 = vadd.f32 %v89, %v156
    %158 = vmatmul.f32.gmra.mxu0 %v119
    %v159 = vpop.f32.mrf.mxu0
    %v160 = vadd.f32 %v94, %v159
    %161 = vdwg.mxu0
    %v162 = vmax.f32 %v139, 0.0
    %v163 = vmax.f32 %v142, 0.0
    %v164 = vmax.f32 %v145, 0.0
    %v165 = vmax.f32 %v148, 0.0
    %v166 = vmax.f32 %v151, 0.0
    %v167 = vmax.f32 %v154, 0.0
    %v168 = vmax.f32 %v157, 0.0
    %v169 = vmax.f32 %v160, 0.0
    %170 = vset.pattern.permute.xlu0 1
    %171 = vperm.xlu0 %170, %v48
    %v172 = vpop.permute.xlu0 %171
    %174 = vset.pattern.permute.xlu0 1
    %175 = vperm.xlu0 %174, %v49
    %v176 = vpop.permute.xlu0 %175
    %178 = vset.pattern.permute.xlu0 1
    %179 = vperm.xlu0 %178, %v50
    %v180 = vpop.permute.xlu0 %179
    %182 = vset.pattern.permute.xlu0 1
    %183 = vperm.xlu0 %182, %v51
    %v184 = vpop.permute.xlu0 %183
    %186 = vset.pattern.permute.xlu0 1
    %187 = vperm.xlu0 %186, %v52
    %v188 = vpop.permute.xlu0 %187
    %190 = vset.pattern.permute.xlu0 1
    %191 = vperm.xlu0 %190, %v53
    %v192 = vpop.permute.xlu0 %191
    %194 = vset.pattern.permute.xlu0 1
    %195 = vperm.xlu0 %194, %v54
    %v196 = vpop.permute.xlu0 %195
    %198 = vset.pattern.permute.xlu0 1
    %199 = vperm.xlu0 %198, %v55
    %v200 = vpop.permute.xlu0 %199
    %v202 = vmul.f32 %v162, %v172
    %v203 = vmul.f32 %v163, %v176
    %v204 = vmul.f32 %v164, %v180
    %v205 = vmul.f32 %v165, %v184
    %v206 = vmul.f32 %v166, %v188
    %v207 = vmul.f32 %v167, %v192
    %v208 = vmul.f32 %v168, %v196
    %v209 = vmul.f32 %v169, %v200
    %v210 = vadd.f32 %v202, %v203
    %v211 = vadd.f32 %v210, %v204
    %v212 = vadd.f32 %v211, %v205
    %v213 = vadd.f32 %v212, %v206
    %v214 = vadd.f32 %v213, %v207
    %v215 = vadd.f32 %v214, %v208
    %v216 = vadd.f32 %v215, %v209
    %v217 = vrot.slane %v216, 4
    %v218 = vadd.f32 %v216, %v217
    %v219 = vrot.slane %v218, 2
    %v220 = vadd.f32 %v218, %v219
    %v221 = vrot.slane %v220, 1
    %v222 = vadd.f32 %v220, %v221
    %s223 = sld [smem:[#allocation2]]
    %v224 = vstv %s223
    %v225 = vmul.f32 %v224, %v39
    %v226 = vadd.f32 %v222, %v225
    %s227 = sld [smem:[#allocation2 + $0x1]]
    %v228 = vstv %s227
    %v229 = vadd.f32 %v226, %v228
    %v230 = vxor.u32 %v229, 2147483648
    %v231 = vmul.f32 %v230, 1.442695
    %v232 = vpow.pop %v231
    %v233 = vadd.f32 %v232, 1.0
    %v234 = vrcp.pop %v233
    %v235 = vmul.f32 %v233, %v234
    %v236 = vsub.f32 1.0, %v235
    %v237 = vmul.f32 %v234, %v236
    %v238 = vadd.f32 %v234, %v237
    %vm239 = vweird.f32 %v233
    %vm240 = vweird.f32 %v234
    %vm241 = vmor %vm239, %vm240
    %v242 = vsel %vm241, %v234, %v238
    %v243 = vand.u32 2147483647, %v233
    %vm244 = vcmp.eq.f32.partialorder %v243, 8.507059e+37
    %v245 = vand.u32 %v233, 2147483648
    %v246 = vor.u32 1.1754944e-38, %v245
    %v247 = vsel %vm244, %v246, %v242
    %v248 = vmul.f32 1.0, %v247
    %249 = vst [vmem:[%s4] sm:$0x1] %v248
    // Predicated region
    $region22: #{hunet_forward.1} parent=1 // pred_check
      _
    $region23: #{hunet_forward.1} parent=1 // pred_check_branch
      %251 = sbr.rel (0) target = $region25
    $region24: #{hunet_forward.1} parent=1 // pred_region
      _
    $region25: #{hunet_forward.1} parent=1 // pred_fallthru
      _
    // Predicated region
    $region26: #{hunet_forward.1} parent=1 // pred_check
      _
    $region27: #{hunet_forward.1} parent=1 // pred_check_branch
      %253 = sbr.rel (0) target = $region29
    $region28: #{hunet_forward.1} parent=1 // pred_region
      _
    $region29: #{hunet_forward.1} parent=1 // pred_fallthru
      _
    %254 = vsyncpa [#allocation3], 1

</llo_original>
